<compile_context>
chip_gen: v6e
topology: v6e:2x2x1
jax: 0.10.0
libtpu: 0.0.40
codegen_flags: <defaults>
</compile_context>

<pallas_src>
import functools

import jax
import jax.numpy as jnp
from jax.experimental import pallas as pl
from jax.experimental.pallas import tpu as pltpu


def _routing_kernel(x_ref, w_ref, g_ref, out_ref, *, num_iterations):
    # x_ref : (In, TB, InD) bf16  -- input capsules, batch tile on sublanes
    # w_ref : (In, InD, ND) bf16  -- lane-packed weights, ND = N * D (= 128)
    # g_ref : (ND, ND)      bf16  -- 0/1 block group-sum matrix (per-capsule)
    # out_ref: (TB, ND)     f32   -- lane-dense output, viewed (B, N, D) outside
    x = x_ref[...]                                   # (In, TB, InD)
    w = w_ref[...]                                   # (In, InD, ND)
    g_mat = g_ref[...]                               # (ND, ND)
    in_caps = x.shape[0]

    # --- u_hat on the MXU: batched bf16 matmul, In is the batch dim ---------
    # u_hat[i, b, n*D + d] = sum_k x[b, i, k] * W[n, i, k, d]
    u_hat = jnp.einsum("ibk,ikn->ibn", x, w,
                       preferred_element_type=jnp.float32)    # (In, TB, ND) f32

    def squash(s):                                            # s: (TB, ND) f32
        # Per-capsule squared norm, broadcast back over that capsule's D
        # lanes: lane-dense bf16 MXU matmul against the 0/1 group-sum matrix.
        norm = jnp.dot((s * s).astype(jnp.bfloat16), g_mat,
                       preferred_element_type=jnp.float32)    # (TB, ND)
        # norm/(norm+1) * s / sqrt(norm)  ==  s * sqrt(norm) / (norm+1)
        # (exactly 0 at norm == 0; divide moved to the EUP).
        factor = jnp.sqrt(norm) * pl.reciprocal(norm + 1.0, approx=True)
        return s * factor

    def softmax_step(b_log):
        # softmax over the input-capsule axis (torch dim=2), fused with the
        # weighted sum: normalize once on the (TB, ND) reduction, not on the
        # full (In, TB, ND) tensor.
        m = jnp.max(b_log, axis=0, keepdims=True)              # (1, TB, ND)
        e = jnp.exp(b_log - m)                                 # (In, TB, ND)
        z = jnp.sum(e, axis=0)                                 # (TB, ND)
        s = jnp.sum(e * u_hat, axis=0) * pl.reciprocal(z, approx=True)
        return squash(s)

    # --- routing iterations --------------------------------------------------
    # Iteration 0 has b == 0, so softmax is exactly uniform (1/In): skip it.
    s0 = jnp.sum(u_hat, axis=0) * (1.0 / in_caps)              # (TB, ND)
    v = squash(s0)

    if num_iterations >= 2:
        b_log = u_hat * v[None]                                # b = 0 + u_hat*v
        for _ in range(num_iterations - 2):
            v = softmax_step(b_log)
            b_log = b_log + u_hat * v[None]
        v = softmax_step(b_log)

    out_ref[...] = v.astype(out_ref.dtype)


def _round_up(v, m):
    return ((v + m - 1) // m) * m


def routing_capsules(x, W, num_iterations=3, batch_tile=256):
    """x: (B, In, InD) f32; W: (1, N, In, InD, D) f32 (torch layout)."""
    B, In, InD = x.shape
    _, N, In_w, InD_w, D = W.shape
    assert In == In_w and InD == InD_w
    ND = N * D

    # Lane-packed, grid-invariant weight (In, InD, N*D); bf16 MXU operand.
    w_packed = (jnp.transpose(W[0], (1, 2, 0, 3))
                .reshape(In, InD, ND).astype(jnp.bfloat16))
    # Batch on the sublane axis, In as the leading batch dim of the in-kernel
    # batched matmul; bf16 MXU operand (halves x DMA bytes).
    x_t = jnp.transpose(x, (1, 0, 2)).astype(jnp.bfloat16)     # (In, B, InD)

    # Hoisted 0/1 group-sum matrix: lanes j, j' belong to the same output
    # capsule iff j // D == j' // D.  Exactly representable in bf16.
    gi = jax.lax.broadcasted_iota(jnp.int32, (ND, ND), 0) // D
    gj = jax.lax.broadcasted_iota(jnp.int32, (ND, ND), 1) // D
    g_mat = (gi == gj).astype(jnp.bfloat16)                    # (ND, ND)

    # Batch tile: sublane-aligned (multiple of 8), capped (batch_tile=256 keeps
    # per-step f32 temporaries ~ a few MiB, safe under v7x's 64 MiB VMEM), and
    # <= ceil(B/2) when the batch allows it so the single "parallel" grid axis
    # has >= 2 steps (v7x: 2 TensorCores).  The batch is zero-padded to a
    # multiple of the tile; padded rows compute finite garbage and are sliced
    # off (no tb=B fallback, so large awkward B can't blow VMEM).
    if B <= 8:
        tb = _round_up(max(B, 1), 8)
    else:
        tb = min(batch_tile, _round_up(pl.cdiv(B, 2), 8))
    B_pad = _round_up(B, tb)
    if B_pad != B:
        x_t = jnp.pad(x_t, ((0, 0), (0, B_pad - B), (0, 0)))
    grid = (B_pad // tb,)

    kernel = functools.partial(_routing_kernel, num_iterations=num_iterations)

    out_flat = pl.pallas_call(
        kernel,
        out_shape=jax.ShapeDtypeStruct((B_pad, ND), x.dtype),
        grid=grid,
        in_specs=[
            pl.BlockSpec((In, tb, InD), lambda b: (0, b, 0)),
            # Grid-invariant inputs: one DMA, revisited across steps.
            pl.BlockSpec((In, InD, ND), lambda b: (0, 0, 0)),
            pl.BlockSpec((ND, ND), lambda b: (0, 0)),
        ],
        out_specs=pl.BlockSpec((tb, ND), lambda b: (b, 0)),
        compiler_params=pltpu.CompilerParams(
            dimension_semantics=("parallel",)),
    )(x_t, w_packed, g_mat)

    return out_flat[:B].reshape(B, N, D)


# ----------------------------- pure-JAX reference ----------------------------
def _squash_ref(v, axis=-1, epsilon=1e-8):
    norm = jnp.sum(v * v, axis=axis, keepdims=True)
    return norm / (norm + 1.0) * v / (jnp.sqrt(norm) + epsilon)


def routing_capsules_ref(x, W, num_iterations=3):
    """Exact-f32 elementwise reference mirroring the torch forward."""
    # u_hat[b, n, i, d] = sum_k x[b, i, k] * W[0, n, i, k, d]
    u_hat = jnp.sum(x[:, None, :, :, None] * W, axis=3)        # (B, N, In, D)
    b = jnp.zeros_like(u_hat)

    def step(b):
        c = jax.nn.softmax(b, axis=2)
        s = jnp.sum(c * u_hat, axis=2, keepdims=True)          # (B, N, 1, D)
        return _squash_ref(s)

    for _ in range(num_iterations - 1):
        v = step(b)
        b = b + u_hat * v
    v = step(b)
    return v[:, :, 0, :]                                       # (B, N, D)


if __name__ == "__main__":
    # Small shapes consistent with RoutingCapsules inside CapsNet:
    #   batch=2, in_capsules_num=16, in_capsules_dim=8,
    #   capsules_num=8, capsules_dim=16 (N*D = 128 -> lane-dense), 3 iterations.
    B, In, InD = 2, 16, 8
    N, D = 8, 16
    num_iterations = 3

    key = jax.random.PRNGKey(0)
    kx, kw = jax.random.split(key)
    x = jax.random.normal(kx, (B, In, InD), dtype=jnp.float32)
    W = jax.random.normal(kw, (1, N, In, InD, D), dtype=jnp.float32)

    out = routing_capsules(x, W, num_iterations=num_iterations)
    out = jax.block_until_ready(out)

    ref = routing_capsules_ref(x, W, num_iterations=num_iterations)
    assert out.shape == ref.shape == (B, N, D)
    # Tolerance covers the bf16 MXU operands (u_hat / per-capsule norm) and
    # the approx EUP reciprocals; deviations are ~1e-3..1e-2.  An algorithmic
    # error would be O(1), so this still validates the routing semantics.
    assert jnp.allclose(out, ref, atol=3e-2, rtol=3e-2), \
        float(jnp.max(jnp.abs(out - ref)))

    print("KERNEL_OK")
</pallas_src>

<mosaic_0001>
module attributes {stable_mosaic.version = 11 : i64} {
  func.func @_routing_kernel(%arg0: i32, %arg1: memref<16x8x8xbf16, #tpu.memory_space<vmem>>, %arg2: memref<16x8x128xbf16, #tpu.memory_space<vmem>>, %arg3: memref<128x128xbf16, #tpu.memory_space<vmem>>, %arg4: memref<8x128xf32, #tpu.memory_space<vmem>>) attributes {dimension_semantics = [#tpu.dimension_semantics<parallel>], iteration_bounds = array<i64: 1>, scalar_prefetch = 0 : i64, scratch_operands = 0 : i64, tpu.core_type = #tpu.core_type<tc>, window_params = [{transform_indices = @transform_0, window_bounds = array<i64: 16, 8, 8>}, {pipeline_mode = #tpu.pipeline_mode<synchronous>, transform_indices = @transform_1, window_bounds = array<i64: 16, 8, 128>}, {pipeline_mode = #tpu.pipeline_mode<synchronous>, transform_indices = @transform_2, window_bounds = array<i64: 128, 128>}, {transform_indices = @transform_3, window_bounds = array<i64: 8, 128>}]} {
    %c0 = arith.constant 0 : index
    %c0_0 = arith.constant 0 : index
    %c0_1 = arith.constant 0 : index
    %0 = vector.load %arg1[%c0, %c0_0, %c0_1] : memref<16x8x8xbf16, #tpu.memory_space<vmem>>, vector<16x8x8xbf16>
    %c0_2 = arith.constant 0 : index
    %c0_3 = arith.constant 0 : index
    %c0_4 = arith.constant 0 : index
    %1 = vector.load %arg2[%c0_2, %c0_3, %c0_4] : memref<16x8x128xbf16, #tpu.memory_space<vmem>>, vector<16x8x128xbf16>
    %c0_5 = arith.constant 0 : index
    %c0_6 = arith.constant 0 : index
    %2 = vector.load %arg3[%c0_5, %c0_6] : memref<128x128xbf16, #tpu.memory_space<vmem>>, vector<128x128xbf16>
    "tpu.trace_start"() <{level = 10 : i32, message = "ibk,ikn->ibn"}> : () -> ()
    %cst = arith.constant dense<0.000000e+00> : vector<16x8x128xf32>
    %3 = tpu.matmul %0, %1, %cst {dimension_numbers = #tpu.dot_dimension_numbers<[2], [1], [1], [2], [0, 0, 0, 1, 1, 2], [0], [0]>} : vector<16x8x8xbf16>, vector<16x8x128xbf16>, vector<16x8x128xf32> -> vector<16x8x128xf32>
    "tpu.trace_stop"() : () -> ()
    %cst_7 = arith.constant dense<0.000000e+00> : vector<8x128xf32>
    %4 = vector.multi_reduction <add>, %3, %cst_7 [0] : vector<16x8x128xf32> to vector<8x128xf32>
    %cst_8 = arith.constant 6.250000e-02 : f32
    %5 = vector.broadcast %cst_8 : f32 to vector<8x128xf32>
    %6 = arith.mulf %4, %5 : vector<8x128xf32>
    %7 = arith.mulf %6, %6 : vector<8x128xf32>
    %8 = arith.truncf %7 : vector<8x128xf32> to vector<8x128xbf16>
    %cst_9 = arith.constant dense<0.000000e+00> : vector<8x128xf32>
    %9 = tpu.matmul %8, %2, %cst_9 {dimension_numbers = #tpu.dot_dimension_numbers<[1], [0], [0], [1], [0, 0, 1, 1], [], []>} : vector<8x128xbf16>, vector<128x128xbf16>, vector<8x128xf32> -> vector<8x128xf32>
    %10 = math.sqrt %9 : vector<8x128xf32>
    %cst_10 = arith.constant 1.000000e+00 : f32
    %11 = vector.broadcast %cst_10 : f32 to vector<8x128xf32>
    %12 = arith.addf %9, %11 : vector<8x128xf32>
    %13 = tpu.reciprocal %12 {approx = true} : vector<8x128xf32> -> vector<8x128xf32>
    %14 = arith.mulf %10, %13 : vector<8x128xf32>
    %15 = arith.mulf %6, %14 : vector<8x128xf32>
    %16 = vector.shape_cast %15 : vector<8x128xf32> to vector<1x8x128xf32>
    %17 = vector.broadcast %16 : vector<1x8x128xf32> to vector<16x8x128xf32>
    %18 = arith.mulf %3, %17 : vector<16x8x128xf32>
    %cst_11 = arith.constant dense<0xFF800000> : vector<8x128xf32>
    %19 = vector.multi_reduction <maximumf>, %18, %cst_11 [0] : vector<16x8x128xf32> to vector<8x128xf32>
    %20 = vector.shape_cast %19 : vector<8x128xf32> to vector<1x8x128xf32>
    %21 = vector.broadcast %20 : vector<1x8x128xf32> to vector<16x8x128xf32>
    %22 = arith.subf %18, %21 : vector<16x8x128xf32>
    %23 = math.exp %22 : vector<16x8x128xf32>
    %cst_12 = arith.constant dense<0.000000e+00> : vector<8x128xf32>
    %24 = vector.multi_reduction <add>, %23, %cst_12 [0] : vector<16x8x128xf32> to vector<8x128xf32>
    %25 = arith.mulf %23, %3 : vector<16x8x128xf32>
    %cst_13 = arith.constant dense<0.000000e+00> : vector<8x128xf32>
    %26 = vector.multi_reduction <add>, %25, %cst_13 [0] : vector<16x8x128xf32> to vector<8x128xf32>
    %27 = tpu.reciprocal %24 {approx = true} : vector<8x128xf32> -> vector<8x128xf32>
    %28 = arith.mulf %26, %27 : vector<8x128xf32>
    %29 = arith.mulf %28, %28 : vector<8x128xf32>
    %30 = arith.truncf %29 : vector<8x128xf32> to vector<8x128xbf16>
    %cst_14 = arith.constant dense<0.000000e+00> : vector<8x128xf32>
    %31 = tpu.matmul %30, %2, %cst_14 {dimension_numbers = #tpu.dot_dimension_numbers<[1], [0], [0], [1], [0, 0, 1, 1], [], []>} : vector<8x128xbf16>, vector<128x128xbf16>, vector<8x128xf32> -> vector<8x128xf32>
    %32 = math.sqrt %31 : vector<8x128xf32>
    %cst_15 = arith.constant 1.000000e+00 : f32
    %33 = vector.broadcast %cst_15 : f32 to vector<8x128xf32>
    %34 = arith.addf %31, %33 : vector<8x128xf32>
    %35 = tpu.reciprocal %34 {approx = true} : vector<8x128xf32> -> vector<8x128xf32>
    %36 = arith.mulf %32, %35 : vector<8x128xf32>
    %37 = arith.mulf %28, %36 : vector<8x128xf32>
    %38 = vector.shape_cast %37 : vector<8x128xf32> to vector<1x8x128xf32>
    %39 = vector.broadcast %38 : vector<1x8x128xf32> to vector<16x8x128xf32>
    %40 = arith.mulf %3, %39 : vector<16x8x128xf32>
    %41 = arith.addf %18, %40 : vector<16x8x128xf32>
    %cst_16 = arith.constant dense<0xFF800000> : vector<8x128xf32>
    %42 = vector.multi_reduction <maximumf>, %41, %cst_16 [0] : vector<16x8x128xf32> to vector<8x128xf32>
    %43 = vector.shape_cast %42 : vector<8x128xf32> to vector<1x8x128xf32>
    %44 = vector.broadcast %43 : vector<1x8x128xf32> to vector<16x8x128xf32>
    %45 = arith.subf %41, %44 : vector<16x8x128xf32>
    %46 = math.exp %45 : vector<16x8x128xf32>
    %cst_17 = arith.constant dense<0.000000e+00> : vector<8x128xf32>
    %47 = vector.multi_reduction <add>, %46, %cst_17 [0] : vector<16x8x128xf32> to vector<8x128xf32>
    %48 = arith.mulf %46, %3 : vector<16x8x128xf32>
    %cst_18 = arith.constant dense<0.000000e+00> : vector<8x128xf32>
    %49 = vector.multi_reduction <add>, %48, %cst_18 [0] : vector<16x8x128xf32> to vector<8x128xf32>
    %50 = tpu.reciprocal %47 {approx = true} : vector<8x128xf32> -> vector<8x128xf32>
    %51 = arith.mulf %49, %50 : vector<8x128xf32>
    %52 = arith.mulf %51, %51 : vector<8x128xf32>
    %53 = arith.truncf %52 : vector<8x128xf32> to vector<8x128xbf16>
    %cst_19 = arith.constant dense<0.000000e+00> : vector<8x128xf32>
    %54 = tpu.matmul %53, %2, %cst_19 {dimension_numbers = #tpu.dot_dimension_numbers<[1], [0], [0], [1], [0, 0, 1, 1], [], []>} : vector<8x128xbf16>, vector<128x128xbf16>, vector<8x128xf32> -> vector<8x128xf32>
    %55 = math.sqrt %54 : vector<8x128xf32>
    %cst_20 = arith.constant 1.000000e+00 : f32
    %56 = vector.broadcast %cst_20 : f32 to vector<8x128xf32>
    %57 = arith.addf %54, %56 : vector<8x128xf32>
    %58 = tpu.reciprocal %57 {approx = true} : vector<8x128xf32> -> vector<8x128xf32>
    %59 = arith.mulf %55, %58 : vector<8x128xf32>
    %60 = arith.mulf %51, %59 : vector<8x128xf32>
    %c0_21 = arith.constant 0 : index
    %c0_22 = arith.constant 0 : index
    %61 = vector.load %arg4[%c0_21, %c0_22] : memref<8x128xf32, #tpu.memory_space<vmem>>, vector<8x128xf32>
    tpu.vector_store %arg4[%c0_21, %c0_22], %60 {strides = array<i32>} : memref<8x128xf32, #tpu.memory_space<vmem>>, vector<8x128xf32>,
    return
  }
  func.func @transform_0(%arg0: i32) -> (i32, i32, i32) {
    %c0_i32 = arith.constant 0 : i32
    %c0_i32_0 = arith.constant 0 : i32
    %c0_i32_1 = arith.constant 0 : i32
    return %c0_i32, %arg0, %c0_i32_0 : i32, i32, i32
  }
  func.func @transform_1(%arg0: i32) -> (i32, i32, i32) {
    %c0_i32 = arith.constant 0 : i32
    %c0_i32_0 = arith.constant 0 : i32
    %c0_i32_1 = arith.constant 0 : i32
    %c0_i32_2 = arith.constant 0 : i32
    return %c0_i32, %c0_i32_0, %c0_i32_1 : i32, i32, i32
  }
  func.func @transform_2(%arg0: i32) -> (i32, i32) {
    %c0_i32 = arith.constant 0 : i32
    %c0_i32_0 = arith.constant 0 : i32
    %c0_i32_1 = arith.constant 0 : i32
    return %c0_i32, %c0_i32_0 : i32, i32
  }
  func.func @transform_3(%arg0: i32) -> (i32, i32) {
    %c0_i32 = arith.constant 0 : i32
    %c0_i32_0 = arith.constant 0 : i32
    return %arg0, %c0_i32 : i32, i32
  }
}

</mosaic_0001>

<llo_original>
// kernel: tpu_custom_call.1
$region0: #{tpu_custom_call.1}
  #allocation0 [shape = 'u32[]', space=smem, size = 0x4, offset = 0x4, fixed_abs, tag = 'smem constant byte address 0x4 - core index']
  #allocation1 [shape = 'u32[144,128]{1,0:T(1,128)}', space=vmem, size = 0x12000, scoped, tag = 'internal scratch']
  %s0 = inlined_call_operand.vmem [shape: bf16[16,8,8], index: 0, kind: input, shape index: {}]
  %s1 = inlined_call_operand.vmem [shape: bf16[16,8,128], index: 1, kind: input, shape index: {}]
  %s2 = inlined_call_operand.hbm [shape: bf16[128,128], index: 2, kind: input, shape index: {}]
  %s3 = inlined_call_operand.hbm [shape: f32[8,128], index: 3, kind: output, shape index: {}]
  %s4 = sld [smem:[#allocation0]]
  $region26: #{tpu_custom_call.1} parent=0
    _
  %s6 = ssub.s32 1, %s4
  %s7 = scalar_select 0, %s6, %s4
  $region1: #{tpu_custom_call.1} parent=0
    #allocation2 [shape = 'u8[32768]{0}', space=vmem, size = 0x8000, scoped, tag = 'input window, operand 2, single buffered']
    #allocation3 [shape = 's32[1]{0}', space=sflag, size = 0x4, scoped, tag = 'scoped memory for tpu_custom_call.1']
    #allocation4 [shape = 's32[1]{0}', space=sflag, size = 0x4, scoped, tag = 'scoped memory for tpu_custom_call.1']
    #allocation5 [shape = 'u8[4096]{0}', space=vmem, size = 0x1000, scoped, tag = 'output window, operand 0, single buffered']
    %8 = vsyncpa [#allocation3], 0
    %9 = vsyncpa [#allocation4], 0
    // Predicated region
    $region2: #{tpu_custom_call.1} parent=1 // pred_check
      _
    $region3: #{tpu_custom_call.1} parent=1 // pred_check_branch
      %11 = sbr.rel (0) target = $region5
    $region4: #{tpu_custom_call.1} parent=1 // pred_region
      _
    $region5: #{tpu_custom_call.1} parent=1 // pred_fallthru
      _
    // Predicated region
    $region6: #{tpu_custom_call.1} parent=1 // pred_check
      _
    $region7: #{tpu_custom_call.1} parent=1 // pred_check_branch
      %13 = sbr.rel (0) target = $region9
    $region8: #{tpu_custom_call.1} parent=1 // pred_region
      _
    $region9: #{tpu_custom_call.1} parent=1 // pred_fallthru
      _
    // Predicated region
    $region10: #{tpu_custom_call.1} parent=1 // pred_check
      _
    $region11: #{tpu_custom_call.1} parent=1 // pred_check_branch
      %15 = sbr.rel (0) target = $region13
    $region12: #{tpu_custom_call.1} parent=1 // pred_region
      %s17 = ssub.s32 1024, 1024
      %18 = vsyncadd [#allocation3], %s17
      %s19 = sshll.u32 [#allocation2], 4
      %s20 = int_to_ptr.vmem [resolvable:$true] %s19
      %25 = dma.hbm_to_vmem [thread:$0]  %s2, 1024, %s20, [#allocation3], 64, 64, 4
    $region13: #{tpu_custom_call.1} parent=1 // pred_fallthru
      _
    // Predicated region
    $region14: #{tpu_custom_call.1} parent=1 // pred_check
      _
    $region15: #{tpu_custom_call.1} parent=1 // pred_check_branch
      %27 = sbr.rel (0) target = $region17
    $region16: #{tpu_custom_call.1} parent=1 // pred_region
      %28 = dma.done [#allocation3], 1024
    $region17: #{tpu_custom_call.1} parent=1 // pred_fallthru
      _
    %v30 = vld [vmem:[%s0] sm:$0xf]
    %v31 = vld [vmem:[%s0 + $0x4] sm:$0xf]
    %v32 = vld [vmem:[%s0 + $0x8] sm:$0xf]
    %v33 = vld [vmem:[%s0 + $0xc] sm:$0xf]
    %v34 = vld [vmem:[%s0 + $0x10] sm:$0xf]
    %v35 = vld [vmem:[%s0 + $0x14] sm:$0xf]
    %v36 = vld [vmem:[%s0 + $0x18] sm:$0xf]
    %v37 = vld [vmem:[%s0 + $0x1c] sm:$0xf]
    %v38 = vld [vmem:[%s0 + $0x20] sm:$0xf]
    %v39 = vld [vmem:[%s0 + $0x24] sm:$0xf]
    %v40 = vld [vmem:[%s0 + $0x28] sm:$0xf]
    %v41 = vld [vmem:[%s0 + $0x2c] sm:$0xf]
    %v42 = vld [vmem:[%s0 + $0x30] sm:$0xf]
    %v43 = vld [vmem:[%s0 + $0x34] sm:$0xf]
    %v44 = vld [vmem:[%s0 + $0x38] sm:$0xf]
    %v45 = vld [vmem:[%s0 + $0x3c] sm:$0xf]
    %v46 = vld [vmem:[%s1] sm:$0xf]
    %v47 = vld [vmem:[%s1 + $0x4] sm:$0xf]
    %v48 = vld [vmem:[%s1 + $0x8] sm:$0xf]
    %v49 = vld [vmem:[%s1 + $0xc] sm:$0xf]
    %v50 = vld [vmem:[%s1 + $0x10] sm:$0xf]
    %v51 = vld [vmem:[%s1 + $0x14] sm:$0xf]
    %v52 = vld [vmem:[%s1 + $0x18] sm:$0xf]
    %v53 = vld [vmem:[%s1 + $0x1c] sm:$0xf]
    %v54 = vld [vmem:[%s1 + $0x20] sm:$0xf]
    %v55 = vld [vmem:[%s1 + $0x24] sm:$0xf]
    %v56 = vld [vmem:[%s1 + $0x28] sm:$0xf]
    %v57 = vld [vmem:[%s1 + $0x2c] sm:$0xf]
    %v58 = vld [vmem:[%s1 + $0x30] sm:$0xf]
    %v59 = vld [vmem:[%s1 + $0x34] sm:$0xf]
    %v60 = vld [vmem:[%s1 + $0x38] sm:$0xf]
    %v61 = vld [vmem:[%s1 + $0x3c] sm:$0xf]
    %v62 = vld [vmem:[#allocation2] sm:$0xf]
    %v63 = vld [vmem:[#allocation2 + $0x4] sm:$0xf]
    %v64 = vld [vmem:[#allocation2 + $0x8] sm:$0xf]
    %v65 = vld [vmem:[#allocation2 + $0xc] sm:$0xf]
    %v66 = vld [vmem:[#allocation2 + $0x10] sm:$0xf]
    %v67 = vld [vmem:[#allocation2 + $0x14] sm:$0xf]
    %v68 = vld [vmem:[#allocation2 + $0x18] sm:$0xf]
    %v69 = vld [vmem:[#allocation2 + $0x1c] sm:$0xf]
    %v70 = vld [vmem:[#allocation2 + $0x20] sm:$0xf]
    %v71 = vld [vmem:[#allocation2 + $0x24] sm:$0xf]
    %v72 = vld [vmem:[#allocation2 + $0x28] sm:$0xf]
    %v73 = vld [vmem:[#allocation2 + $0x2c] sm:$0xf]
    %v74 = vld [vmem:[#allocation2 + $0x30] sm:$0xf]
    %v75 = vld [vmem:[#allocation2 + $0x34] sm:$0xf]
    %v76 = vld [vmem:[#allocation2 + $0x38] sm:$0xf]
    %v77 = vld [vmem:[#allocation2 + $0x3c] sm:$0xf]
    %vm78 = vcmask 64512
    %v80 = vsel %vm78, %v30, 0
    %vm82 = vcmask 1043456
    %v84 = vsel %vm82, %v46, 0
    %86 = vmatprep.subr.bf16.mxu0 0
    %87 = vmatpush1.bf16.msra.mxu0 0
    %88 = vmatprep.subr.bf16.mxu0 0
    %89 = vmatpush1.bf16.msra.mxu0 0
    %90 = vmatprep.subr.bf16.mxu0 0
    %91 = vmatpush1.bf16.msra.mxu0 0
    %92 = vmatprep.subr.bf16.mxu0 0
    %93 = vmatpush1.bf16.msra.mxu0 0
    %94 = vmatprep.subr.bf16.mxu0 0
    %95 = vmatpush1.bf16.msra.mxu0 0
    %96 = vmatprep.subr.bf16.mxu0 0
    %97 = vmatpush1.bf16.msra.mxu0 0
    %98 = vmatprep.subr.bf16.mxu0 0
    %99 = vmatpush1.bf16.msra.mxu0 0
    %100 = vmatprep.subr.bf16.mxu0 0
    %101 = vmatpush1.bf16.msra.mxu0 %v84
    %102 = vmatprep.subr.bf16.mxu0 0
    %103 = vmatpush2.bf16.msra.mxu0 0
    %104 = vmatprep.subr.bf16.mxu0 0
    %105 = vmatpush2.bf16.msra.mxu0 0
    %106 = vmatprep.subr.bf16.mxu0 0
    %107 = vmatpush2.bf16.msra.mxu0 0
    %108 = vmatprep.subr.bf16.mxu0 0
    %109 = vmatpush2.bf16.msra.mxu0 0
    %110 = vmatprep.subr.bf16.mxu0 0
    %111 = vmatpush2.bf16.msra.mxu0 0
    %112 = vmatprep.subr.bf16.mxu0 0
    %113 = vmatpush2.bf16.msra.mxu0 0
    %114 = vmatprep.subr.bf16.mxu0 0
    %115 = vmatpush2.bf16.msra.mxu0 0
    %116 = vmatprep.subr.bf16.mxu0 0
    %117 = vmatpush2.bf16.msra.mxu0 0
    %118 = vmatprep.mubr.bf16.mxu0 0
    %119 = vmatmul.mubr.bf16.gmra.mxu0 %v80
    %v120 = vpop.f32.mrf.mxu0
    %v121 = vadd.f32 0.0, %v120
    %v122 = vpop.f32.mrf.mxu0
    %v123 = vpop.f32.mrf.mxu0
    %v124 = vpop.f32.mrf.mxu0
    %125 = vdwg.mxu0
    %v127 = vsel %vm78, %v31, 0
    %v130 = vsel %vm82, %v47, 0
    %132 = vmatprep.subr.bf16.mxu0 0
    %133 = vmatpush1.bf16.msra.mxu0 0
    %134 = vmatprep.subr.bf16.mxu0 0
    %135 = vmatpush1.bf16.msra.mxu0 0
    %136 = vmatprep.subr.bf16.mxu0 0
    %137 = vmatpush1.bf16.msra.mxu0 0
    %138 = vmatprep.subr.bf16.mxu0 0
    %139 = vmatpush1.bf16.msra.mxu0 0
    %140 = vmatprep.subr.bf16.mxu0 0
    %141 = vmatpush1.bf16.msra.mxu0 0
    %142 = vmatprep.subr.bf16.mxu0 0
    %143 = vmatpush1.bf16.msra.mxu0 0
    %144 = vmatprep.subr.bf16.mxu0 0
    %145 = vmatpush1.bf16.msra.mxu0 0
    %146 = vmatprep.subr.bf16.mxu0 0
    %147 = vmatpush1.bf16.msra.mxu0 %v130
    %148 = vmatprep.subr.bf16.mxu0 0
    %149 = vmatpush2.bf16.msra.mxu0 0
    %150 = vmatprep.subr.bf16.mxu0 0
    %151 = vmatpush2.bf16.msra.mxu0 0
    %152 = vmatprep.subr.bf16.mxu0 0
    %153 = vmatpush2.bf16.msra.mxu0 0
    %154 = vmatprep.subr.bf16.mxu0 0
    %155 = vmatpush2.bf16.msra.mxu0 0
    %156 = vmatprep.subr.bf16.mxu0 0
    %157 = vmatpush2.bf16.msra.mxu0 0
    %158 = vmatprep.subr.bf16.mxu0 0
    %159 = vmatpush2.bf16.msra.mxu0 0
    %160 = vmatprep.subr.bf16.mxu0 0
    %161 = vmatpush2.bf16.msra.mxu0 0
    %162 = vmatprep.subr.bf16.mxu0 0
    %163 = vmatpush2.bf16.msra.mxu0 0
    %164 = vmatprep.mubr.bf16.mxu0 0
    %165 = vmatmul.mubr.bf16.gmra.mxu0 %v127
    %v166 = vpop.f32.mrf.mxu0
    %v167 = vadd.f32 0.0, %v166
    %v168 = vpop.f32.mrf.mxu0
    %v169 = vpop.f32.mrf.mxu0
    %v170 = vpop.f32.mrf.mxu0
    %171 = vdwg.mxu0
    %v173 = vsel %vm78, %v32, 0
    %v176 = vsel %vm82, %v48, 0
    %178 = vmatprep.subr.bf16.mxu0 0
    %179 = vmatpush1.bf16.msra.mxu0 0
    %180 = vmatprep.subr.bf16.mxu0 0
    %181 = vmatpush1.bf16.msra.mxu0 0
    %182 = vmatprep.subr.bf16.mxu0 0
    %183 = vmatpush1.bf16.msra.mxu0 0
    %184 = vmatprep.subr.bf16.mxu0 0
    %185 = vmatpush1.bf16.msra.mxu0 0
    %186 = vmatprep.subr.bf16.mxu0 0
    %187 = vmatpush1.bf16.msra.mxu0 0
    %188 = vmatprep.subr.bf16.mxu0 0
    %189 = vmatpush1.bf16.msra.mxu0 0
    %190 = vmatprep.subr.bf16.mxu0 0
    %191 = vmatpush1.bf16.msra.mxu0 0
    %192 = vmatprep.subr.bf16.mxu0 0
    %193 = vmatpush1.bf16.msra.mxu0 %v176
    %194 = vmatprep.subr.bf16.mxu0 0
    %195 = vmatpush2.bf16.msra.mxu0 0
    %196 = vmatprep.subr.bf16.mxu0 0
    %197 = vmatpush2.bf16.msra.mxu0 0
    %198 = vmatprep.subr.bf16.mxu0 0
    %199 = vmatpush2.bf16.msra.mxu0 0
    %200 = vmatprep.subr.bf16.mxu0 0
    %201 = vmatpush2.bf16.msra.mxu0 0
    %202 = vmatprep.subr.bf16.mxu0 0
    %203 = vmatpush2.bf16.msra.mxu0 0
    %204 = vmatprep.subr.bf16.mxu0 0
    %205 = vmatpush2.bf16.msra.mxu0 0
    %206 = vmatprep.subr.bf16.mxu0 0
    %207 = vmatpush2.bf16.msra.mxu0 0
    %208 = vmatprep.subr.bf16.mxu0 0
    %209 = vmatpush2.bf16.msra.mxu0 0
    %210 = vmatprep.mubr.bf16.mxu0 0
    %211 = vmatmul.mubr.bf16.gmra.mxu0 %v173
    %v212 = vpop.f32.mrf.mxu0
    %v213 = vadd.f32 0.0, %v212
    %v214 = vpop.f32.mrf.mxu0
    %v215 = vpop.f32.mrf.mxu0
    %v216 = vpop.f32.mrf.mxu0
    %217 = vdwg.mxu0
    %v219 = vsel %vm78, %v33, 0
    %v222 = vsel %vm82, %v49, 0
    %224 = vmatprep.subr.bf16.mxu0 0
    %225 = vmatpush1.bf16.msra.mxu0 0
    %226 = vmatprep.subr.bf16.mxu0 0
    %227 = vmatpush1.bf16.msra.mxu0 0
    %228 = vmatprep.subr.bf16.mxu0 0
    %229 = vmatpush1.bf16.msra.mxu0 0
    %230 = vmatprep.subr.bf16.mxu0 0
    %231 = vmatpush1.bf16.msra.mxu0 0
    %232 = vmatprep.subr.bf16.mxu0 0
    %233 = vmatpush1.bf16.msra.mxu0 0
    %234 = vmatprep.subr.bf16.mxu0 0
    %235 = vmatpush1.bf16.msra.mxu0 0
    %236 = vmatprep.subr.bf16.mxu0 0
    %237 = vmatpush1.bf16.msra.mxu0 0
    %238 = vmatprep.subr.bf16.mxu0 0
    %239 = vmatpush1.bf16.msra.mxu0 %v222
    %240 = vmatprep.subr.bf16.mxu0 0
    %241 = vmatpush2.bf16.msra.mxu0 0
    %242 = vmatprep.subr.bf16.mxu0 0
    %243 = vmatpush2.bf16.msra.mxu0 0
    %244 = vmatprep.subr.bf16.mxu0 0
    %245 = vmatpush2.bf16.msra.mxu0 0
    %246 = vmatprep.subr.bf16.mxu0 0
    %247 = vmatpush2.bf16.msra.mxu0 0
    %248 = vmatprep.subr.bf16.mxu0 0
    %249 = vmatpush2.bf16.msra.mxu0 0
    %250 = vmatprep.subr.bf16.mxu0 0
    %251 = vmatpush2.bf16.msra.mxu0 0
    %252 = vmatprep.subr.bf16.mxu0 0
    %253 = vmatpush2.bf16.msra.mxu0 0
    %254 = vmatprep.subr.bf16.mxu0 0
    %255 = vmatpush2.bf16.msra.mxu0 0
    %256 = vmatprep.mubr.bf16.mxu0 0
    %257 = vmatmul.mubr.bf16.gmra.mxu0 %v219
    %v258 = vpop.f32.mrf.mxu0
    %v259 = vadd.f32 0.0, %v258
    %v260 = vpop.f32.mrf.mxu0
    %v261 = vpop.f32.mrf.mxu0
    %v262 = vpop.f32.mrf.mxu0
    %263 = vdwg.mxu0
    %v265 = vsel %vm78, %v34, 0
    %v268 = vsel %vm82, %v50, 0
    %270 = vmatprep.subr.bf16.mxu0 0
    %271 = vmatpush1.bf16.msra.mxu0 0
    %272 = vmatprep.subr.bf16.mxu0 0
    %273 = vmatpush1.bf16.msra.mxu0 0
    %274 = vmatprep.subr.bf16.mxu0 0
    %275 = vmatpush1.bf16.msra.mxu0 0
    %276 = vmatprep.subr.bf16.mxu0 0
    %277 = vmatpush1.bf16.msra.mxu0 0
    %278 = vmatprep.subr.bf16.mxu0 0
    %279 = vmatpush1.bf16.msra.mxu0 0
    %280 = vmatprep.subr.bf16.mxu0 0
    %281 = vmatpush1.bf16.msra.mxu0 0
    %282 = vmatprep.subr.bf16.mxu0 0
    %283 = vmatpush1.bf16.msra.mxu0 0
    %284 = vmatprep.subr.bf16.mxu0 0
    %285 = vmatpush1.bf16.msra.mxu0 %v268
    %286 = vmatprep.subr.bf16.mxu0 0
    %287 = vmatpush2.bf16.msra.mxu0 0
    %288 = vmatprep.subr.bf16.mxu0 0
    %289 = vmatpush2.bf16.msra.mxu0 0
    %290 = vmatprep.subr.bf16.mxu0 0
    %291 = vmatpush2.bf16.msra.mxu0 0
    %292 = vmatprep.subr.bf16.mxu0 0
    %293 = vmatpush2.bf16.msra.mxu0 0
    %294 = vmatprep.subr.bf16.mxu0 0
    %295 = vmatpush2.bf16.msra.mxu0 0
    %296 = vmatprep.subr.bf16.mxu0 0
    %297 = vmatpush2.bf16.msra.mxu0 0
    %298 = vmatprep.subr.bf16.mxu0 0
    %299 = vmatpush2.bf16.msra.mxu0 0
    %300 = vmatprep.subr.bf16.mxu0 0
    %301 = vmatpush2.bf16.msra.mxu0 0
    %302 = vmatprep.mubr.bf16.mxu0 0
    %303 = vmatmul.mubr.bf16.gmra.mxu0 %v265
    %v304 = vpop.f32.mrf.mxu0
    %v305 = vadd.f32 0.0, %v304
    %v306 = vpop.f32.mrf.mxu0
    %v307 = vpop.f32.mrf.mxu0
    %v308 = vpop.f32.mrf.mxu0
    %309 = vdwg.mxu0
    %v311 = vsel %vm78, %v35, 0
    %v314 = vsel %vm82, %v51, 0
    %316 = vmatprep.subr.bf16.mxu0 0
    %317 = vmatpush1.bf16.msra.mxu0 0
    %318 = vmatprep.subr.bf16.mxu0 0
    %319 = vmatpush1.bf16.msra.mxu0 0
    %320 = vmatprep.subr.bf16.mxu0 0
    %321 = vmatpush1.bf16.msra.mxu0 0
    %322 = vmatprep.subr.bf16.mxu0 0
    %323 = vmatpush1.bf16.msra.mxu0 0
    %324 = vmatprep.subr.bf16.mxu0 0
    %325 = vmatpush1.bf16.msra.mxu0 0
    %326 = vmatprep.subr.bf16.mxu0 0
    %327 = vmatpush1.bf16.msra.mxu0 0
    %328 = vmatprep.subr.bf16.mxu0 0
    %329 = vmatpush1.bf16.msra.mxu0 0
    %330 = vmatprep.subr.bf16.mxu0 0
    %331 = vmatpush1.bf16.msra.mxu0 %v314
    %332 = vmatprep.subr.bf16.mxu0 0
    %333 = vmatpush2.bf16.msra.mxu0 0
    %334 = vmatprep.subr.bf16.mxu0 0
    %335 = vmatpush2.bf16.msra.mxu0 0
    %336 = vmatprep.subr.bf16.mxu0 0
    %337 = vmatpush2.bf16.msra.mxu0 0
    %338 = vmatprep.subr.bf16.mxu0 0
    %339 = vmatpush2.bf16.msra.mxu0 0
    %340 = vmatprep.subr.bf16.mxu0 0
    %341 = vmatpush2.bf16.msra.mxu0 0
    %342 = vmatprep.subr.bf16.mxu0 0
    %343 = vmatpush2.bf16.msra.mxu0 0
    %344 = vmatprep.subr.bf16.mxu0 0
    %345 = vmatpush2.bf16.msra.mxu0 0
    %346 = vmatprep.subr.bf16.mxu0 0
    %347 = vmatpush2.bf16.msra.mxu0 0
    %348 = vmatprep.mubr.bf16.mxu0 0
    %349 = vmatmul.mubr.bf16.gmra.mxu0 %v311
    %v350 = vpop.f32.mrf.mxu0
    %v351 = vadd.f32 0.0, %v350
    %v352 = vpop.f32.mrf.mxu0
    %v353 = vpop.f32.mrf.mxu0
    %v354 = vpop.f32.mrf.mxu0
    %355 = vdwg.mxu0
    %v357 = vsel %vm78, %v36, 0
    %v360 = vsel %vm82, %v52, 0
    %362 = vmatprep.subr.bf16.mxu0 0
    %363 = vmatpush1.bf16.msra.mxu0 0
    %364 = vmatprep.subr.bf16.mxu0 0
    %365 = vmatpush1.bf16.msra.mxu0 0
    %366 = vmatprep.subr.bf16.mxu0 0
    %367 = vmatpush1.bf16.msra.mxu0 0
    %368 = vmatprep.subr.bf16.mxu0 0
    %369 = vmatpush1.bf16.msra.mxu0 0
    %370 = vmatprep.subr.bf16.mxu0 0
    %371 = vmatpush1.bf16.msra.mxu0 0
    %372 = vmatprep.subr.bf16.mxu0 0
    %373 = vmatpush1.bf16.msra.mxu0 0
    %374 = vmatprep.subr.bf16.mxu0 0
    %375 = vmatpush1.bf16.msra.mxu0 0
    %376 = vmatprep.subr.bf16.mxu0 0
    %377 = vmatpush1.bf16.msra.mxu0 %v360
    %378 = vmatprep.subr.bf16.mxu0 0
    %379 = vmatpush2.bf16.msra.mxu0 0
    %380 = vmatprep.subr.bf16.mxu0 0
    %381 = vmatpush2.bf16.msra.mxu0 0
    %382 = vmatprep.subr.bf16.mxu0 0
    %383 = vmatpush2.bf16.msra.mxu0 0
    %384 = vmatprep.subr.bf16.mxu0 0
    %385 = vmatpush2.bf16.msra.mxu0 0
    %386 = vmatprep.subr.bf16.mxu0 0
    %387 = vmatpush2.bf16.msra.mxu0 0
    %388 = vmatprep.subr.bf16.mxu0 0
    %389 = vmatpush2.bf16.msra.mxu0 0
    %390 = vmatprep.subr.bf16.mxu0 0
    %391 = vmatpush2.bf16.msra.mxu0 0
    %392 = vmatprep.subr.bf16.mxu0 0
    %393 = vmatpush2.bf16.msra.mxu0 0
    %394 = vmatprep.mubr.bf16.mxu0 0
    %395 = vmatmul.mubr.bf16.gmra.mxu0 %v357
    %v396 = vpop.f32.mrf.mxu0
    %v397 = vadd.f32 0.0, %v396
    %v398 = vpop.f32.mrf.mxu0
    %v399 = vpop.f32.mrf.mxu0
    %v400 = vpop.f32.mrf.mxu0
    %401 = vdwg.mxu0
    %v403 = vsel %vm78, %v37, 0
    %v406 = vsel %vm82, %v53, 0
    %408 = vmatprep.subr.bf16.mxu0 0
    %409 = vmatpush1.bf16.msra.mxu0 0
    %410 = vmatprep.subr.bf16.mxu0 0
    %411 = vmatpush1.bf16.msra.mxu0 0
    %412 = vmatprep.subr.bf16.mxu0 0
    %413 = vmatpush1.bf16.msra.mxu0 0
    %414 = vmatprep.subr.bf16.mxu0 0
    %415 = vmatpush1.bf16.msra.mxu0 0
    %416 = vmatprep.subr.bf16.mxu0 0
    %417 = vmatpush1.bf16.msra.mxu0 0
    %418 = vmatprep.subr.bf16.mxu0 0
    %419 = vmatpush1.bf16.msra.mxu0 0
    %420 = vmatprep.subr.bf16.mxu0 0
    %421 = vmatpush1.bf16.msra.mxu0 0
    %422 = vmatprep.subr.bf16.mxu0 0
    %423 = vmatpush1.bf16.msra.mxu0 %v406
    %424 = vmatprep.subr.bf16.mxu0 0
    %425 = vmatpush2.bf16.msra.mxu0 0
    %426 = vmatprep.subr.bf16.mxu0 0
    %427 = vmatpush2.bf16.msra.mxu0 0
    %428 = vmatprep.subr.bf16.mxu0 0
    %429 = vmatpush2.bf16.msra.mxu0 0
    %430 = vmatprep.subr.bf16.mxu0 0
    %431 = vmatpush2.bf16.msra.mxu0 0
    %432 = vmatprep.subr.bf16.mxu0 0
    %433 = vmatpush2.bf16.msra.mxu0 0
    %434 = vmatprep.subr.bf16.mxu0 0
    %435 = vmatpush2.bf16.msra.mxu0 0
    %436 = vmatprep.subr.bf16.mxu0 0
    %437 = vmatpush2.bf16.msra.mxu0 0
    %438 = vmatprep.subr.bf16.mxu0 0
    %439 = vmatpush2.bf16.msra.mxu0 0
    %440 = vmatprep.mubr.bf16.mxu0 0
    %441 = vmatmul.mubr.bf16.gmra.mxu0 %v403
    %v442 = vpop.f32.mrf.mxu0
    %v443 = vadd.f32 0.0, %v442
    %v444 = vpop.f32.mrf.mxu0
    %v445 = vpop.f32.mrf.mxu0
    %v446 = vpop.f32.mrf.mxu0
    %447 = vdwg.mxu0
    %v449 = vsel %vm78, %v38, 0
    %v452 = vsel %vm82, %v54, 0
    %454 = vmatprep.subr.bf16.mxu0 0
    %455 = vmatpush1.bf16.msra.mxu0 0
    %456 = vmatprep.subr.bf16.mxu0 0
    %457 = vmatpush1.bf16.msra.mxu0 0
    %458 = vmatprep.subr.bf16.mxu0 0
    %459 = vmatpush1.bf16.msra.mxu0 0
    %460 = vmatprep.subr.bf16.mxu0 0
    %461 = vmatpush1.bf16.msra.mxu0 0
    %462 = vmatprep.subr.bf16.mxu0 0
    %463 = vmatpush1.bf16.msra.mxu0 0
    %464 = vmatprep.subr.bf16.mxu0 0
    %465 = vmatpush1.bf16.msra.mxu0 0
    %466 = vmatprep.subr.bf16.mxu0 0
    %467 = vmatpush1.bf16.msra.mxu0 0
    %468 = vmatprep.subr.bf16.mxu0 0
    %469 = vmatpush1.bf16.msra.mxu0 %v452
    %470 = vmatprep.subr.bf16.mxu0 0
    %471 = vmatpush2.bf16.msra.mxu0 0
    %472 = vmatprep.subr.bf16.mxu0 0
    %473 = vmatpush2.bf16.msra.mxu0 0
    %474 = vmatprep.subr.bf16.mxu0 0
    %475 = vmatpush2.bf16.msra.mxu0 0
    %476 = vmatprep.subr.bf16.mxu0 0
    %477 = vmatpush2.bf16.msra.mxu0 0
    %478 = vmatprep.subr.bf16.mxu0 0
    %479 = vmatpush2.bf16.msra.mxu0 0
    %480 = vmatprep.subr.bf16.mxu0 0
    %481 = vmatpush2.bf16.msra.mxu0 0
    %482 = vmatprep.subr.bf16.mxu0 0
    %483 = vmatpush2.bf16.msra.mxu0 0
    %484 = vmatprep.subr.bf16.mxu0 0
    %485 = vmatpush2.bf16.msra.mxu0 0
    %486 = vmatprep.mubr.bf16.mxu0 0
    %487 = vmatmul.mubr.bf16.gmra.mxu0 %v449
    %v488 = vpop.f32.mrf.mxu0
    %v489 = vadd.f32 0.0, %v488
    %v490 = vpop.f32.mrf.mxu0
    %v491 = vpop.f32.mrf.mxu0
    %v492 = vpop.f32.mrf.mxu0
    %493 = vdwg.mxu0
    %v495 = vsel %vm78, %v39, 0
    %v498 = vsel %vm82, %v55, 0
    %500 = vmatprep.subr.bf16.mxu0 0
    %501 = vmatpush1.bf16.msra.mxu0 0
    %502 = vmatprep.subr.bf16.mxu0 0
    %503 = vmatpush1.bf16.msra.mxu0 0
    %504 = vmatprep.subr.bf16.mxu0 0
    %505 = vmatpush1.bf16.msra.mxu0 0
    %506 = vmatprep.subr.bf16.mxu0 0
    %507 = vmatpush1.bf16.msra.mxu0 0
    %508 = vmatprep.subr.bf16.mxu0 0
    %509 = vmatpush1.bf16.msra.mxu0 0
    %510 = vmatprep.subr.bf16.mxu0 0
    %511 = vmatpush1.bf16.msra.mxu0 0
    %512 = vmatprep.subr.bf16.mxu0 0
    %513 = vmatpush1.bf16.msra.mxu0 0
    %514 = vmatprep.subr.bf16.mxu0 0
    %515 = vmatpush1.bf16.msra.mxu0 %v498
    %516 = vmatprep.subr.bf16.mxu0 0
    %517 = vmatpush2.bf16.msra.mxu0 0
    %518 = vmatprep.subr.bf16.mxu0 0
    %519 = vmatpush2.bf16.msra.mxu0 0
    %520 = vmatprep.subr.bf16.mxu0 0
    %521 = vmatpush2.bf16.msra.mxu0 0
    %522 = vmatprep.subr.bf16.mxu0 0
    %523 = vmatpush2.bf16.msra.mxu0 0
    %524 = vmatprep.subr.bf16.mxu0 0
    %525 = vmatpush2.bf16.msra.mxu0 0
    %526 = vmatprep.subr.bf16.mxu0 0
    %527 = vmatpush2.bf16.msra.mxu0 0
    %528 = vmatprep.subr.bf16.mxu0 0
    %529 = vmatpush2.bf16.msra.mxu0 0
    %530 = vmatprep.subr.bf16.mxu0 0
    %531 = vmatpush2.bf16.msra.mxu0 0
    %532 = vmatprep.mubr.bf16.mxu0 0
    %533 = vmatmul.mubr.bf16.gmra.mxu0 %v495
    %v534 = vpop.f32.mrf.mxu0
    %v535 = vadd.f32 0.0, %v534
    %v536 = vpop.f32.mrf.mxu0
    %v537 = vpop.f32.mrf.mxu0
    %v538 = vpop.f32.mrf.mxu0
    %539 = vdwg.mxu0
    %v541 = vsel %vm78, %v40, 0
    %v544 = vsel %vm82, %v56, 0
    %546 = vmatprep.subr.bf16.mxu0 0
    %547 = vmatpush1.bf16.msra.mxu0 0
    %548 = vmatprep.subr.bf16.mxu0 0
    %549 = vmatpush1.bf16.msra.mxu0 0
    %550 = vmatprep.subr.bf16.mxu0 0
    %551 = vmatpush1.bf16.msra.mxu0 0
    %552 = vmatprep.subr.bf16.mxu0 0
    %553 = vmatpush1.bf16.msra.mxu0 0
    %554 = vmatprep.subr.bf16.mxu0 0
    %555 = vmatpush1.bf16.msra.mxu0 0
    %556 = vmatprep.subr.bf16.mxu0 0
    %557 = vmatpush1.bf16.msra.mxu0 0
    %558 = vmatprep.subr.bf16.mxu0 0
    %559 = vmatpush1.bf16.msra.mxu0 0
    %560 = vmatprep.subr.bf16.mxu0 0
    %561 = vmatpush1.bf16.msra.mxu0 %v544
    %562 = vmatprep.subr.bf16.mxu0 0
    %563 = vmatpush2.bf16.msra.mxu0 0
    %564 = vmatprep.subr.bf16.mxu0 0
    %565 = vmatpush2.bf16.msra.mxu0 0
    %566 = vmatprep.subr.bf16.mxu0 0
    %567 = vmatpush2.bf16.msra.mxu0 0
    %568 = vmatprep.subr.bf16.mxu0 0
    %569 = vmatpush2.bf16.msra.mxu0 0
    %570 = vmatprep.subr.bf16.mxu0 0
    %571 = vmatpush2.bf16.msra.mxu0 0
    %572 = vmatprep.subr.bf16.mxu0 0
    %573 = vmatpush2.bf16.msra.mxu0 0
    %574 = vmatprep.subr.bf16.mxu0 0
    %575 = vmatpush2.bf16.msra.mxu0 0
    %576 = vmatprep.subr.bf16.mxu0 0
    %577 = vmatpush2.bf16.msra.mxu0 0
    %578 = vmatprep.mubr.bf16.mxu0 0
    %579 = vmatmul.mubr.bf16.gmra.mxu0 %v541
    %v580 = vpop.f32.mrf.mxu0
    %v581 = vadd.f32 0.0, %v580
    %v582 = vpop.f32.mrf.mxu0
    %v583 = vpop.f32.mrf.mxu0
    %v584 = vpop.f32.mrf.mxu0
    %585 = vdwg.mxu0
    %v587 = vsel %vm78, %v41, 0
    %v590 = vsel %vm82, %v57, 0
    %592 = vmatprep.subr.bf16.mxu0 0
    %593 = vmatpush1.bf16.msra.mxu0 0
    %594 = vmatprep.subr.bf16.mxu0 0
    %595 = vmatpush1.bf16.msra.mxu0 0
    %596 = vmatprep.subr.bf16.mxu0 0
    %597 = vmatpush1.bf16.msra.mxu0 0
    %598 = vmatprep.subr.bf16.mxu0 0
    %599 = vmatpush1.bf16.msra.mxu0 0
    %600 = vmatprep.subr.bf16.mxu0 0
    %601 = vmatpush1.bf16.msra.mxu0 0
    %602 = vmatprep.subr.bf16.mxu0 0
    %603 = vmatpush1.bf16.msra.mxu0 0
    %604 = vmatprep.subr.bf16.mxu0 0
    %605 = vmatpush1.bf16.msra.mxu0 0
    %606 = vmatprep.subr.bf16.mxu0 0
    %607 = vmatpush1.bf16.msra.mxu0 %v590
    %608 = vmatprep.subr.bf16.mxu0 0
    %609 = vmatpush2.bf16.msra.mxu0 0
    %610 = vmatprep.subr.bf16.mxu0 0
    %611 = vmatpush2.bf16.msra.mxu0 0
    %612 = vmatprep.subr.bf16.mxu0 0
    %613 = vmatpush2.bf16.msra.mxu0 0
    %614 = vmatprep.subr.bf16.mxu0 0
    %615 = vmatpush2.bf16.msra.mxu0 0
    %616 = vmatprep.subr.bf16.mxu0 0
    %617 = vmatpush2.bf16.msra.mxu0 0
    %618 = vmatprep.subr.bf16.mxu0 0
    %619 = vmatpush2.bf16.msra.mxu0 0
    %620 = vmatprep.subr.bf16.mxu0 0
    %621 = vmatpush2.bf16.msra.mxu0 0
    %622 = vmatprep.subr.bf16.mxu0 0
    %623 = vmatpush2.bf16.msra.mxu0 0
    %624 = vmatprep.mubr.bf16.mxu0 0
    %625 = vmatmul.mubr.bf16.gmra.mxu0 %v587
    %v626 = vpop.f32.mrf.mxu0
    %v627 = vadd.f32 0.0, %v626
    %v628 = vpop.f32.mrf.mxu0
    %v629 = vpop.f32.mrf.mxu0
    %v630 = vpop.f32.mrf.mxu0
    %631 = vdwg.mxu0
    %v633 = vsel %vm78, %v42, 0
    %v636 = vsel %vm82, %v58, 0
    %638 = vmatprep.subr.bf16.mxu0 0
    %639 = vmatpush1.bf16.msra.mxu0 0
    %640 = vmatprep.subr.bf16.mxu0 0
    %641 = vmatpush1.bf16.msra.mxu0 0
    %642 = vmatprep.subr.bf16.mxu0 0
    %643 = vmatpush1.bf16.msra.mxu0 0
    %644 = vmatprep.subr.bf16.mxu0 0
    %645 = vmatpush1.bf16.msra.mxu0 0
    %646 = vmatprep.subr.bf16.mxu0 0
    %647 = vmatpush1.bf16.msra.mxu0 0
    %648 = vmatprep.subr.bf16.mxu0 0
    %649 = vmatpush1.bf16.msra.mxu0 0
    %650 = vmatprep.subr.bf16.mxu0 0
    %651 = vmatpush1.bf16.msra.mxu0 0
    %652 = vmatprep.subr.bf16.mxu0 0
    %653 = vmatpush1.bf16.msra.mxu0 %v636
    %654 = vmatprep.subr.bf16.mxu0 0
    %655 = vmatpush2.bf16.msra.mxu0 0
    %656 = vmatprep.subr.bf16.mxu0 0
    %657 = vmatpush2.bf16.msra.mxu0 0
    %658 = vmatprep.subr.bf16.mxu0 0
    %659 = vmatpush2.bf16.msra.mxu0 0
    %660 = vmatprep.subr.bf16.mxu0 0
    %661 = vmatpush2.bf16.msra.mxu0 0
    %662 = vmatprep.subr.bf16.mxu0 0
    %663 = vmatpush2.bf16.msra.mxu0 0
    %664 = vmatprep.subr.bf16.mxu0 0
    %665 = vmatpush2.bf16.msra.mxu0 0
    %666 = vmatprep.subr.bf16.mxu0 0
    %667 = vmatpush2.bf16.msra.mxu0 0
    %668 = vmatprep.subr.bf16.mxu0 0
    %669 = vmatpush2.bf16.msra.mxu0 0
    %670 = vmatprep.mubr.bf16.mxu0 0
    %671 = vmatmul.mubr.bf16.gmra.mxu0 %v633
    %v672 = vpop.f32.mrf.mxu0
    %v673 = vadd.f32 0.0, %v672
    %v674 = vpop.f32.mrf.mxu0
    %v675 = vpop.f32.mrf.mxu0
    %v676 = vpop.f32.mrf.mxu0
    %677 = vdwg.mxu0
    %v679 = vsel %vm78, %v43, 0
    %v682 = vsel %vm82, %v59, 0
    %684 = vmatprep.subr.bf16.mxu0 0
    %685 = vmatpush1.bf16.msra.mxu0 0
    %686 = vmatprep.subr.bf16.mxu0 0
    %687 = vmatpush1.bf16.msra.mxu0 0
    %688 = vmatprep.subr.bf16.mxu0 0
    %689 = vmatpush1.bf16.msra.mxu0 0
    %690 = vmatprep.subr.bf16.mxu0 0
    %691 = vmatpush1.bf16.msra.mxu0 0
    %692 = vmatprep.subr.bf16.mxu0 0
    %693 = vmatpush1.bf16.msra.mxu0 0
    %694 = vmatprep.subr.bf16.mxu0 0
    %695 = vmatpush1.bf16.msra.mxu0 0
    %696 = vmatprep.subr.bf16.mxu0 0
    %697 = vmatpush1.bf16.msra.mxu0 0
    %698 = vmatprep.subr.bf16.mxu0 0
    %699 = vmatpush1.bf16.msra.mxu0 %v682
    %700 = vmatprep.subr.bf16.mxu0 0
    %701 = vmatpush2.bf16.msra.mxu0 0
    %702 = vmatprep.subr.bf16.mxu0 0
    %703 = vmatpush2.bf16.msra.mxu0 0
    %704 = vmatprep.subr.bf16.mxu0 0
    %705 = vmatpush2.bf16.msra.mxu0 0
    %706 = vmatprep.subr.bf16.mxu0 0
    %707 = vmatpush2.bf16.msra.mxu0 0
    %708 = vmatprep.subr.bf16.mxu0 0
    %709 = vmatpush2.bf16.msra.mxu0 0
    %710 = vmatprep.subr.bf16.mxu0 0
    %711 = vmatpush2.bf16.msra.mxu0 0
    %712 = vmatprep.subr.bf16.mxu0 0
    %713 = vmatpush2.bf16.msra.mxu0 0
    %714 = vmatprep.subr.bf16.mxu0 0
    %715 = vmatpush2.bf16.msra.mxu0 0
    %716 = vmatprep.mubr.bf16.mxu0 0
    %717 = vmatmul.mubr.bf16.gmra.mxu0 %v679
    %v718 = vpop.f32.mrf.mxu0
    %v719 = vadd.f32 0.0, %v718
    %v720 = vpop.f32.mrf.mxu0
    %v721 = vpop.f32.mrf.mxu0
    %v722 = vpop.f32.mrf.mxu0
    %723 = vdwg.mxu0
    %v725 = vsel %vm78, %v44, 0
    %v728 = vsel %vm82, %v60, 0
    %730 = vmatprep.subr.bf16.mxu0 0
    %731 = vmatpush1.bf16.msra.mxu0 0
    %732 = vmatprep.subr.bf16.mxu0 0
    %733 = vmatpush1.bf16.msra.mxu0 0
    %734 = vmatprep.subr.bf16.mxu0 0
    %735 = vmatpush1.bf16.msra.mxu0 0
    %736 = vmatprep.subr.bf16.mxu0 0
    %737 = vmatpush1.bf16.msra.mxu0 0
    %738 = vmatprep.subr.bf16.mxu0 0
    %739 = vmatpush1.bf16.msra.mxu0 0
    %740 = vmatprep.subr.bf16.mxu0 0
    %741 = vmatpush1.bf16.msra.mxu0 0
    %742 = vmatprep.subr.bf16.mxu0 0
    %743 = vmatpush1.bf16.msra.mxu0 0
    %744 = vmatprep.subr.bf16.mxu0 0
    %745 = vmatpush1.bf16.msra.mxu0 %v728
    %746 = vmatprep.subr.bf16.mxu0 0
    %747 = vmatpush2.bf16.msra.mxu0 0
    %748 = vmatprep.subr.bf16.mxu0 0
    %749 = vmatpush2.bf16.msra.mxu0 0
    %750 = vmatprep.subr.bf16.mxu0 0
    %751 = vmatpush2.bf16.msra.mxu0 0
    %752 = vmatprep.subr.bf16.mxu0 0
    %753 = vmatpush2.bf16.msra.mxu0 0
    %754 = vmatprep.subr.bf16.mxu0 0
    %755 = vmatpush2.bf16.msra.mxu0 0
    %756 = vmatprep.subr.bf16.mxu0 0
    %757 = vmatpush2.bf16.msra.mxu0 0
    %758 = vmatprep.subr.bf16.mxu0 0
    %759 = vmatpush2.bf16.msra.mxu0 0
    %760 = vmatprep.subr.bf16.mxu0 0
    %761 = vmatpush2.bf16.msra.mxu0 0
    %762 = vmatprep.mubr.bf16.mxu0 0
    %763 = vmatmul.mubr.bf16.gmra.mxu0 %v725
    %v764 = vpop.f32.mrf.mxu0
    %v765 = vadd.f32 0.0, %v764
    %v766 = vpop.f32.mrf.mxu0
    %v767 = vpop.f32.mrf.mxu0
    %v768 = vpop.f32.mrf.mxu0
    %769 = vdwg.mxu0
    %v771 = vsel %vm78, %v45, 0
    %v774 = vsel %vm82, %v61, 0
    %776 = vmatprep.subr.bf16.mxu0 0
    %777 = vmatpush1.bf16.msra.mxu0 0
    %778 = vmatprep.subr.bf16.mxu0 0
    %779 = vmatpush1.bf16.msra.mxu0 0
    %780 = vmatprep.subr.bf16.mxu0 0
    %781 = vmatpush1.bf16.msra.mxu0 0
    %782 = vmatprep.subr.bf16.mxu0 0
    %783 = vmatpush1.bf16.msra.mxu0 0
    %784 = vmatprep.subr.bf16.mxu0 0
    %785 = vmatpush1.bf16.msra.mxu0 0
    %786 = vmatprep.subr.bf16.mxu0 0
    %787 = vmatpush1.bf16.msra.mxu0 0
    %788 = vmatprep.subr.bf16.mxu0 0
    %789 = vmatpush1.bf16.msra.mxu0 0
    %790 = vmatprep.subr.bf16.mxu0 0
    %791 = vmatpush1.bf16.msra.mxu0 %v774
    %792 = vmatprep.subr.bf16.mxu0 0
    %793 = vmatpush2.bf16.msra.mxu0 0
    %794 = vmatprep.subr.bf16.mxu0 0
    %795 = vmatpush2.bf16.msra.mxu0 0
    %796 = vmatprep.subr.bf16.mxu0 0
    %797 = vmatpush2.bf16.msra.mxu0 0
    %798 = vmatprep.subr.bf16.mxu0 0
    %799 = vmatpush2.bf16.msra.mxu0 0
    %800 = vmatprep.subr.bf16.mxu0 0
    %801 = vmatpush2.bf16.msra.mxu0 0
    %802 = vmatprep.subr.bf16.mxu0 0
    %803 = vmatpush2.bf16.msra.mxu0 0
    %804 = vmatprep.subr.bf16.mxu0 0
    %805 = vmatpush2.bf16.msra.mxu0 0
    %806 = vmatprep.subr.bf16.mxu0 0
    %807 = vmatpush2.bf16.msra.mxu0 0
    %808 = vmatprep.mubr.bf16.mxu0 0
    %809 = vmatmul.mubr.bf16.gmra.mxu0 %v771
    %v810 = vpop.f32.mrf.mxu0
    %v811 = vadd.f32 0.0, %v810
    %v812 = vpop.f32.mrf.mxu0
    %v813 = vpop.f32.mrf.mxu0
    %v814 = vpop.f32.mrf.mxu0
    %815 = vdwg.mxu0
    %v816 = vadd.f32 %v121, %v167
    %v817 = vadd.f32 %v816, %v213
    %v818 = vadd.f32 %v817, %v259
    %v819 = vadd.f32 %v818, %v305
    %v820 = vadd.f32 %v819, %v351
    %v821 = vadd.f32 %v820, %v397
    %v822 = vadd.f32 %v821, %v443
    %v823 = vadd.f32 %v822, %v489
    %v824 = vadd.f32 %v823, %v535
    %v825 = vadd.f32 %v824, %v581
    %v826 = vadd.f32 %v825, %v627
    %v827 = vadd.f32 %v826, %v673
    %v828 = vadd.f32 %v827, %v719
    %v829 = vadd.f32 %v828, %v765
    %v830 = vadd.f32 %v829, %v811
    %v831 = vmul.f32 %v830, 0.0625
    %v832 = vmul.f32 %v831, %v831
    %v833 = vpack.c.bf16 %v832, %v832
    %v850 = vunpack.c.l.b16 %v62
    %v851 = vunpack.c.l.b16 %v63
    %v852 = vunpack.c.l.b16 %v64
    %v853 = vunpack.c.l.b16 %v65
    %v854 = vunpack.c.l.b16 %v66
    %v855 = vunpack.c.l.b16 %v67
    %v856 = vunpack.c.l.b16 %v68
    %v857 = vunpack.c.l.b16 %v69
    %v858 = vunpack.c.l.b16 %v70
    %v859 = vunpack.c.l.b16 %v71
    %v860 = vunpack.c.l.b16 %v72
    %v861 = vunpack.c.l.b16 %v73
    %v862 = vunpack.c.l.b16 %v74
    %v863 = vunpack.c.l.b16 %v75
    %v864 = vunpack.c.l.b16 %v76
    %v865 = vunpack.c.l.b16 %v77
    %v866 = vpack.c.b16 %v851, %v850
    %v867 = vpack.c.b16 %v853, %v852
    %v868 = vpack.c.b16 %v855, %v854
    %v869 = vpack.c.b16 %v857, %v856
    %v870 = vpack.c.b16 %v859, %v858
    %v871 = vpack.c.b16 %v861, %v860
    %v872 = vpack.c.b16 %v863, %v862
    %v873 = vpack.c.b16 %v865, %v864
    %882 = vmatprep.subr.bf16.mxu0 0
    %883 = vmatpush1.bf16.msra.mxu0 %v873
    %884 = vmatprep.subr.bf16.mxu0 0
    %885 = vmatpush1.bf16.msra.mxu0 %v872
    %886 = vmatprep.subr.bf16.mxu0 0
    %887 = vmatpush1.bf16.msra.mxu0 %v871
    %888 = vmatprep.subr.bf16.mxu0 0
    %889 = vmatpush1.bf16.msra.mxu0 %v870
    %890 = vmatprep.subr.bf16.mxu0 0
    %891 = vmatpush1.bf16.msra.mxu0 %v869
    %892 = vmatprep.subr.bf16.mxu0 0
    %893 = vmatpush1.bf16.msra.mxu0 %v868
    %894 = vmatprep.subr.bf16.mxu0 0
    %895 = vmatpush1.bf16.msra.mxu0 %v867
    %896 = vmatprep.subr.bf16.mxu0 0
    %897 = vmatpush1.bf16.msra.mxu0 %v866
    %898 = vmatprep.subr.bf16.mxu0 0
    %899 = vmatpush2.bf16.msra.mxu0 0
    %900 = vmatprep.subr.bf16.mxu0 0
    %901 = vmatpush2.bf16.msra.mxu0 0
    %902 = vmatprep.subr.bf16.mxu0 0
    %903 = vmatpush2.bf16.msra.mxu0 0
    %904 = vmatprep.subr.bf16.mxu0 0
    %905 = vmatpush2.bf16.msra.mxu0 0
    %906 = vmatprep.subr.bf16.mxu0 0
    %907 = vmatpush2.bf16.msra.mxu0 0
    %908 = vmatprep.subr.bf16.mxu0 0
    %909 = vmatpush2.bf16.msra.mxu0 0
    %910 = vmatprep.subr.bf16.mxu0 0
    %911 = vmatpush2.bf16.msra.mxu0 0
    %912 = vmatprep.subr.bf16.mxu0 0
    %913 = vmatpush2.bf16.msra.mxu0 0
    %914 = vmatprep.mubr.bf16.mxu0 0
    %915 = vmatmul.mubr.bf16.gmra.mxu0 %v833
    %v916 = vpop.f32.mrf.mxu0
    %v917 = vadd.f32 0.0, %v916
    %v918 = vpop.f32.mrf.mxu0
    %v919 = vpop.f32.mrf.mxu0
    %v920 = vpop.f32.mrf.mxu0
    %921 = vdwg.mxu0
    %v922 = vrsqrt.pop %v917
    %v923 = vmul.f32 %v917, %v922
    %vm924 = vcmp.eq.f32.partialorder %v917, inf
    %v925 = vsel %vm924, %v917, %v923
    %vm926 = vcmp.eq.f32.partialorder %v917, 0.0
    %v927 = vand.u32 %v917, 2147483648
    %v928 = vsel %vm926, %v927, %v925
    %v929 = vadd.f32 %v917, 1.0
    %v930 = vrcp.pop %v929
    %v931 = vmul.f32 %v928, %v930
    %v932 = vmul.f32 %v831, %v931
    %v933 = vmul.f32 %v121, %v932
    %v934 = vmul.f32 %v167, %v932
    %v935 = vmul.f32 %v213, %v932
    %v936 = vmul.f32 %v259, %v932
    %v937 = vmul.f32 %v305, %v932
    %v938 = vmul.f32 %v351, %v932
    %v939 = vmul.f32 %v397, %v932
    %v940 = vmul.f32 %v443, %v932
    %v941 = vmul.f32 %v489, %v932
    %v942 = vmul.f32 %v535, %v932
    %v943 = vmul.f32 %v581, %v932
    %v944 = vmul.f32 %v627, %v932
    %v945 = vmul.f32 %v673, %v932
    %v946 = vmul.f32 %v719, %v932
    %v947 = vmul.f32 %v765, %v932
    %v948 = vmul.f32 %v811, %v932
    %v949 = vmax.f32 %v933, %v937
    %v950 = vmax.f32 %v934, %v938
    %v951 = vmax.f32 %v935, %v939
    %v952 = vmax.f32 %v936, %v940
    %v953 = vmax.f32 %v949, %v941
    %v954 = vmax.f32 %v950, %v942
    %v955 = vmax.f32 %v951, %v943
    %v956 = vmax.f32 %v952, %v944
    %v957 = vmax.f32 %v953, %v945
    %v958 = vmax.f32 %v954, %v946
    %v959 = vmax.f32 %v955, %v947
    %v960 = vmax.f32 %v956, %v948
    %v961 = vmax.f32 %v957, %v958
    %v962 = vmax.f32 %v959, %v960
    %v963 = vmax.f32 %v961, %v962
    %v964 = vsub.f32 %v933, %v963
    %v965 = vsub.f32 %v934, %v963
    %v966 = vsub.f32 %v935, %v963
    %v967 = vsub.f32 %v936, %v963
    %v968 = vsub.f32 %v937, %v963
    %v969 = vsub.f32 %v938, %v963
    %v970 = vsub.f32 %v939, %v963
    %v971 = vsub.f32 %v940, %v963
    %v972 = vsub.f32 %v941, %v963
    %v973 = vsub.f32 %v942, %v963
    %v974 = vsub.f32 %v943, %v963
    %v975 = vsub.f32 %v944, %v963
    %v976 = vsub.f32 %v945, %v963
    %v977 = vsub.f32 %v946, %v963
    %v978 = vsub.f32 %v947, %v963
    %v979 = vsub.f32 %v948, %v963
    %v980 = vmul.f32 %v964, 1.442695
    %v981 = vpow.pop %v980
    %v982 = vmul.f32 %v965, 1.442695
    %v983 = vpow.pop %v982
    %v984 = vmul.f32 %v966, 1.442695
    %v985 = vpow.pop %v984
    %v986 = vmul.f32 %v967, 1.442695
    %v987 = vpow.pop %v986
    %v988 = vmul.f32 %v968, 1.442695
    %v989 = vpow.pop %v988
    %v990 = vmul.f32 %v969, 1.442695
    %v991 = vpow.pop %v990
    %v992 = vmul.f32 %v970, 1.442695
    %v993 = vpow.pop %v992
    %v994 = vmul.f32 %v971, 1.442695
    %v995 = vpow.pop %v994
    %v996 = vmul.f32 %v972, 1.442695
    %v997 = vpow.pop %v996
    %v998 = vmul.f32 %v973, 1.442695
    %v999 = vpow.pop %v998
    %v1000 = vmul.f32 %v974, 1.442695
    %v1001 = vpow.pop %v1000
    %v1002 = vmul.f32 %v975, 1.442695
    %v1003 = vpow.pop %v1002
    %v1004 = vmul.f32 %v976, 1.442695
    %v1005 = vpow.pop %v1004
    %v1006 = vmul.f32 %v977, 1.442695
    %v1007 = vpow.pop %v1006
    %v1008 = vmul.f32 %v978, 1.442695
    %v1009 = vpow.pop %v1008
    %v1010 = vmul.f32 %v979, 1.442695
    %v1011 = vpow.pop %v1010
    %v1012 = vadd.f32 %v981, %v983
    %v1013 = vadd.f32 %v1012, %v985
    %v1014 = vadd.f32 %v1013, %v987
    %v1015 = vadd.f32 %v1014, %v989
    %v1016 = vadd.f32 %v1015, %v991
    %v1017 = vadd.f32 %v1016, %v993
    %v1018 = vadd.f32 %v1017, %v995
    %v1019 = vadd.f32 %v1018, %v997
    %v1020 = vadd.f32 %v1019, %v999
    %v1021 = vadd.f32 %v1020, %v1001
    %v1022 = vadd.f32 %v1021, %v1003
    %v1023 = vadd.f32 %v1022, %v1005
    %v1024 = vadd.f32 %v1023, %v1007
    %v1025 = vadd.f32 %v1024, %v1009
    %v1026 = vadd.f32 %v1025, %v1011
    %v1027 = vmul.f32 %v981, %v121
    %v1028 = vmul.f32 %v983, %v167
    %v1029 = vmul.f32 %v985, %v213
    %v1030 = vmul.f32 %v987, %v259
    %v1031 = vmul.f32 %v989, %v305
    %v1032 = vmul.f32 %v991, %v351
    %v1033 = vmul.f32 %v993, %v397
    %v1034 = vmul.f32 %v995, %v443
    %v1035 = vmul.f32 %v997, %v489
    %v1036 = vmul.f32 %v999, %v535
    %v1037 = vmul.f32 %v1001, %v581
    %v1038 = vmul.f32 %v1003, %v627
    %v1039 = vmul.f32 %v1005, %v673
    %v1040 = vmul.f32 %v1007, %v719
    %v1041 = vmul.f32 %v1009, %v765
    %v1042 = vmul.f32 %v1011, %v811
    %v1043 = vadd.f32 %v1027, %v1028
    %v1044 = vadd.f32 %v1043, %v1029
    %v1045 = vadd.f32 %v1044, %v1030
    %v1046 = vadd.f32 %v1045, %v1031
    %v1047 = vadd.f32 %v1046, %v1032
    %v1048 = vadd.f32 %v1047, %v1033
    %v1049 = vadd.f32 %v1048, %v1034
    %v1050 = vadd.f32 %v1049, %v1035
    %v1051 = vadd.f32 %v1050, %v1036
    %v1052 = vadd.f32 %v1051, %v1037
    %v1053 = vadd.f32 %v1052, %v1038
    %v1054 = vadd.f32 %v1053, %v1039
    %v1055 = vadd.f32 %v1054, %v1040
    %v1056 = vadd.f32 %v1055, %v1041
    %v1057 = vadd.f32 %v1056, %v1042
    %v1058 = vrcp.pop %v1026
    %v1059 = vmul.f32 %v1057, %v1058
    %v1060 = vmul.f32 %v1059, %v1059
    %v1061 = vpack.c.bf16 %v1060, %v1060
    %1062 = vmatprep.subr.bf16.mxu0 0
    %1063 = vmatpush1.bf16.msra.mxu0 %v873
    %1064 = vmatprep.subr.bf16.mxu0 0
    %1065 = vmatpush1.bf16.msra.mxu0 %v872
    %1066 = vmatprep.subr.bf16.mxu0 0
    %1067 = vmatpush1.bf16.msra.mxu0 %v871
    %1068 = vmatprep.subr.bf16.mxu0 0
    %1069 = vmatpush1.bf16.msra.mxu0 %v870
    %1070 = vmatprep.subr.bf16.mxu0 0
    %1071 = vmatpush1.bf16.msra.mxu0 %v869
    %1072 = vmatprep.subr.bf16.mxu0 0
    %1073 = vmatpush1.bf16.msra.mxu0 %v868
    %1074 = vmatprep.subr.bf16.mxu0 0
    %1075 = vmatpush1.bf16.msra.mxu0 %v867
    %1076 = vmatprep.subr.bf16.mxu0 0
    %1077 = vmatpush1.bf16.msra.mxu0 %v866
    %1078 = vmatprep.subr.bf16.mxu0 0
    %1079 = vmatpush2.bf16.msra.mxu0 0
    %1080 = vmatprep.subr.bf16.mxu0 0
    %1081 = vmatpush2.bf16.msra.mxu0 0
    %1082 = vmatprep.subr.bf16.mxu0 0
    %1083 = vmatpush2.bf16.msra.mxu0 0
    %1084 = vmatprep.subr.bf16.mxu0 0
    %1085 = vmatpush2.bf16.msra.mxu0 0
    %1086 = vmatprep.subr.bf16.mxu0 0
    %1087 = vmatpush2.bf16.msra.mxu0 0
    %1088 = vmatprep.subr.bf16.mxu0 0
    %1089 = vmatpush2.bf16.msra.mxu0 0
    %1090 = vmatprep.subr.bf16.mxu0 0
    %1091 = vmatpush2.bf16.msra.mxu0 0
    %1092 = vmatprep.subr.bf16.mxu0 0
    %1093 = vmatpush2.bf16.msra.mxu0 0
    %1094 = vmatprep.mubr.bf16.mxu0 0
    %1095 = vmatmul.mubr.bf16.gmra.mxu0 %v1061
    %v1096 = vpop.f32.mrf.mxu0
    %v1097 = vadd.f32 0.0, %v1096
    %v1098 = vpop.f32.mrf.mxu0
    %v1099 = vpop.f32.mrf.mxu0
    %v1100 = vpop.f32.mrf.mxu0
    %1101 = vdwg.mxu0
    %v1102 = vrsqrt.pop %v1097
    %v1103 = vmul.f32 %v1097, %v1102
    %vm1104 = vcmp.eq.f32.partialorder %v1097, inf
    %v1105 = vsel %vm1104, %v1097, %v1103
    %vm1106 = vcmp.eq.f32.partialorder %v1097, 0.0
    %v1107 = vand.u32 %v1097, 2147483648
    %v1108 = vsel %vm1106, %v1107, %v1105
    %v1109 = vadd.f32 %v1097, 1.0
    %v1110 = vrcp.pop %v1109
    %v1111 = vmul.f32 %v1108, %v1110
    %v1112 = vmul.f32 %v1059, %v1111
    %v1113 = vmul.f32 %v121, %v1112
    %v1114 = vmul.f32 %v167, %v1112
    %v1115 = vmul.f32 %v213, %v1112
    %v1116 = vmul.f32 %v259, %v1112
    %v1117 = vmul.f32 %v305, %v1112
    %v1118 = vmul.f32 %v351, %v1112
    %v1119 = vmul.f32 %v397, %v1112
    %v1120 = vmul.f32 %v443, %v1112
    %v1121 = vmul.f32 %v489, %v1112
    %v1122 = vmul.f32 %v535, %v1112
    %v1123 = vmul.f32 %v581, %v1112
    %v1124 = vmul.f32 %v627, %v1112
    %v1125 = vmul.f32 %v673, %v1112
    %v1126 = vmul.f32 %v719, %v1112
    %v1127 = vmul.f32 %v765, %v1112
    %v1128 = vmul.f32 %v811, %v1112
    %v1129 = vadd.f32 %v933, %v1113
    %v1130 = vadd.f32 %v934, %v1114
    %v1131 = vadd.f32 %v935, %v1115
    %v1132 = vadd.f32 %v936, %v1116
    %v1133 = vadd.f32 %v937, %v1117
    %v1134 = vadd.f32 %v938, %v1118
    %v1135 = vadd.f32 %v939, %v1119
    %v1136 = vadd.f32 %v940, %v1120
    %v1137 = vadd.f32 %v941, %v1121
    %v1138 = vadd.f32 %v942, %v1122
    %v1139 = vadd.f32 %v943, %v1123
    %v1140 = vadd.f32 %v944, %v1124
    %v1141 = vadd.f32 %v945, %v1125
    %v1142 = vadd.f32 %v946, %v1126
    %v1143 = vadd.f32 %v947, %v1127
    %v1144 = vadd.f32 %v948, %v1128
    %v1145 = vmax.f32 %v1129, %v1133
    %v1146 = vmax.f32 %v1130, %v1134
    %v1147 = vmax.f32 %v1131, %v1135
    %v1148 = vmax.f32 %v1132, %v1136
    %v1149 = vmax.f32 %v1145, %v1137
    %v1150 = vmax.f32 %v1146, %v1138
    %v1151 = vmax.f32 %v1147, %v1139
    %v1152 = vmax.f32 %v1148, %v1140
    %v1153 = vmax.f32 %v1149, %v1141
    %v1154 = vmax.f32 %v1150, %v1142
    %v1155 = vmax.f32 %v1151, %v1143
    %v1156 = vmax.f32 %v1152, %v1144
    %v1157 = vmax.f32 %v1153, %v1154
    %v1158 = vmax.f32 %v1155, %v1156
    %v1159 = vmax.f32 %v1157, %v1158
    %v1160 = vsub.f32 %v1129, %v1159
    %v1161 = vsub.f32 %v1130, %v1159
    %v1162 = vsub.f32 %v1131, %v1159
    %v1163 = vsub.f32 %v1132, %v1159
    %v1164 = vsub.f32 %v1133, %v1159
    %v1165 = vsub.f32 %v1134, %v1159
    %v1166 = vsub.f32 %v1135, %v1159
    %v1167 = vsub.f32 %v1136, %v1159
    %v1168 = vsub.f32 %v1137, %v1159
    %v1169 = vsub.f32 %v1138, %v1159
    %v1170 = vsub.f32 %v1139, %v1159
    %v1171 = vsub.f32 %v1140, %v1159
    %v1172 = vsub.f32 %v1141, %v1159
    %v1173 = vsub.f32 %v1142, %v1159
    %v1174 = vsub.f32 %v1143, %v1159
    %v1175 = vsub.f32 %v1144, %v1159
    %v1176 = vmul.f32 %v1160, 1.442695
    %v1177 = vpow.pop %v1176
    %v1178 = vmul.f32 %v1161, 1.442695
    %v1179 = vpow.pop %v1178
    %v1180 = vmul.f32 %v1162, 1.442695
    %v1181 = vpow.pop %v1180
    %v1182 = vmul.f32 %v1163, 1.442695
    %v1183 = vpow.pop %v1182
    %v1184 = vmul.f32 %v1164, 1.442695
    %v1185 = vpow.pop %v1184
    %v1186 = vmul.f32 %v1165, 1.442695
    %v1187 = vpow.pop %v1186
    %v1188 = vmul.f32 %v1166, 1.442695
    %v1189 = vpow.pop %v1188
    %v1190 = vmul.f32 %v1167, 1.442695
    %v1191 = vpow.pop %v1190
    %v1192 = vmul.f32 %v1168, 1.442695
    %v1193 = vpow.pop %v1192
    %v1194 = vmul.f32 %v1169, 1.442695
    %v1195 = vpow.pop %v1194
    %v1196 = vmul.f32 %v1170, 1.442695
    %v1197 = vpow.pop %v1196
    %v1198 = vmul.f32 %v1171, 1.442695
    %v1199 = vpow.pop %v1198
    %v1200 = vmul.f32 %v1172, 1.442695
    %v1201 = vpow.pop %v1200
    %v1202 = vmul.f32 %v1173, 1.442695
    %v1203 = vpow.pop %v1202
    %v1204 = vmul.f32 %v1174, 1.442695
    %v1205 = vpow.pop %v1204
    %v1206 = vmul.f32 %v1175, 1.442695
    %v1207 = vpow.pop %v1206
    %v1208 = vadd.f32 %v1177, %v1179
    %v1209 = vadd.f32 %v1208, %v1181
    %v1210 = vadd.f32 %v1209, %v1183
    %v1211 = vadd.f32 %v1210, %v1185
    %v1212 = vadd.f32 %v1211, %v1187
    %v1213 = vadd.f32 %v1212, %v1189
    %v1214 = vadd.f32 %v1213, %v1191
    %v1215 = vadd.f32 %v1214, %v1193
    %v1216 = vadd.f32 %v1215, %v1195
    %v1217 = vadd.f32 %v1216, %v1197
    %v1218 = vadd.f32 %v1217, %v1199
    %v1219 = vadd.f32 %v1218, %v1201
    %v1220 = vadd.f32 %v1219, %v1203
    %v1221 = vadd.f32 %v1220, %v1205
    %v1222 = vadd.f32 %v1221, %v1207
    %v1223 = vmul.f32 %v1177, %v121
    %v1224 = vmul.f32 %v1179, %v167
    %v1225 = vmul.f32 %v1181, %v213
    %v1226 = vmul.f32 %v1183, %v259
    %v1227 = vmul.f32 %v1185, %v305
    %v1228 = vmul.f32 %v1187, %v351
    %v1229 = vmul.f32 %v1189, %v397
    %v1230 = vmul.f32 %v1191, %v443
    %v1231 = vmul.f32 %v1193, %v489
    %v1232 = vmul.f32 %v1195, %v535
    %v1233 = vmul.f32 %v1197, %v581
    %v1234 = vmul.f32 %v1199, %v627
    %v1235 = vmul.f32 %v1201, %v673
    %v1236 = vmul.f32 %v1203, %v719
    %v1237 = vmul.f32 %v1205, %v765
    %v1238 = vmul.f32 %v1207, %v811
    %v1239 = vadd.f32 %v1223, %v1224
    %v1240 = vadd.f32 %v1239, %v1225
    %v1241 = vadd.f32 %v1240, %v1226
    %v1242 = vadd.f32 %v1241, %v1227
    %v1243 = vadd.f32 %v1242, %v1228
    %v1244 = vadd.f32 %v1243, %v1229
    %v1245 = vadd.f32 %v1244, %v1230
    %v1246 = vadd.f32 %v1245, %v1231
    %v1247 = vadd.f32 %v1246, %v1232
    %v1248 = vadd.f32 %v1247, %v1233
    %v1249 = vadd.f32 %v1248, %v1234
    %v1250 = vadd.f32 %v1249, %v1235
    %v1251 = vadd.f32 %v1250, %v1236
    %v1252 = vadd.f32 %v1251, %v1237
    %v1253 = vadd.f32 %v1252, %v1238
    %v1254 = vrcp.pop %v1222
    %v1255 = vmul.f32 %v1253, %v1254
    %v1256 = vmul.f32 %v1255, %v1255
    %v1257 = vpack.c.bf16 %v1256, %v1256
    %1258 = vmatprep.subr.bf16.mxu0 0
    %1259 = vmatpush1.bf16.msra.mxu0 %v873
    %1260 = vmatprep.subr.bf16.mxu0 0
    %1261 = vmatpush1.bf16.msra.mxu0 %v872
    %1262 = vmatprep.subr.bf16.mxu0 0
    %1263 = vmatpush1.bf16.msra.mxu0 %v871
    %1264 = vmatprep.subr.bf16.mxu0 0
    %1265 = vmatpush1.bf16.msra.mxu0 %v870
    %1266 = vmatprep.subr.bf16.mxu0 0
    %1267 = vmatpush1.bf16.msra.mxu0 %v869
    %1268 = vmatprep.subr.bf16.mxu0 0
    %1269 = vmatpush1.bf16.msra.mxu0 %v868
    %1270 = vmatprep.subr.bf16.mxu0 0
    %1271 = vmatpush1.bf16.msra.mxu0 %v867
    %1272 = vmatprep.subr.bf16.mxu0 0
    %1273 = vmatpush1.bf16.msra.mxu0 %v866
    %1274 = vmatprep.subr.bf16.mxu0 0
    %1275 = vmatpush2.bf16.msra.mxu0 0
    %1276 = vmatprep.subr.bf16.mxu0 0
    %1277 = vmatpush2.bf16.msra.mxu0 0
    %1278 = vmatprep.subr.bf16.mxu0 0
    %1279 = vmatpush2.bf16.msra.mxu0 0
    %1280 = vmatprep.subr.bf16.mxu0 0
    %1281 = vmatpush2.bf16.msra.mxu0 0
    %1282 = vmatprep.subr.bf16.mxu0 0
    %1283 = vmatpush2.bf16.msra.mxu0 0
    %1284 = vmatprep.subr.bf16.mxu0 0
    %1285 = vmatpush2.bf16.msra.mxu0 0
    %1286 = vmatprep.subr.bf16.mxu0 0
    %1287 = vmatpush2.bf16.msra.mxu0 0
    %1288 = vmatprep.subr.bf16.mxu0 0
    %1289 = vmatpush2.bf16.msra.mxu0 0
    %1290 = vmatprep.mubr.bf16.mxu0 0
    %1291 = vmatmul.mubr.bf16.gmra.mxu0 %v1257
    %v1292 = vpop.f32.mrf.mxu0
    %v1293 = vadd.f32 0.0, %v1292
    %v1294 = vpop.f32.mrf.mxu0
    %v1295 = vpop.f32.mrf.mxu0
    %v1296 = vpop.f32.mrf.mxu0
    %1297 = vdwg.mxu0
    %v1298 = vrsqrt.pop %v1293
    %v1299 = vmul.f32 %v1293, %v1298
    %vm1300 = vcmp.eq.f32.partialorder %v1293, inf
    %v1301 = vsel %vm1300, %v1293, %v1299
    %vm1302 = vcmp.eq.f32.partialorder %v1293, 0.0
    %v1303 = vand.u32 %v1293, 2147483648
    %v1304 = vsel %vm1302, %v1303, %v1301
    %v1305 = vadd.f32 %v1293, 1.0
    %v1306 = vrcp.pop %v1305
    %v1307 = vmul.f32 %v1304, %v1306
    %v1308 = vmul.f32 %v1255, %v1307
    %1309 = vst [vmem:[#allocation5] sm:$0xff] %v1308
    // Predicated region
    $region18: #{tpu_custom_call.1} parent=1 // pred_check
      _
    $region19: #{tpu_custom_call.1} parent=1 // pred_check_branch
      %1311 = sbr.rel (0) target = $region21
    $region20: #{tpu_custom_call.1} parent=1 // pred_region
      %s1313 = ssub.s32 128, 128
      %1314 = vsyncadd [#allocation4], %s1313
      %s1316 = sshll.u32 [#allocation5], 4
      %s1317 = int_to_ptr.vmem [resolvable:$true] %s1316
      %1319 = dma.vmem_to_hbm [thread:$0]  %s1317, 128, %s3, [#allocation4]
    $region21: #{tpu_custom_call.1} parent=1 // pred_fallthru
      _
    // Predicated region
    $region22: #{tpu_custom_call.1} parent=1 // pred_check
      _
    $region23: #{tpu_custom_call.1} parent=1 // pred_check_branch
      %1321 = sbr.rel (0) target = $region25
    $region24: #{tpu_custom_call.1} parent=1 // pred_region
      %1322 = dma.done [#allocation4], 128
    $region25: #{tpu_custom_call.1} parent=1 // pred_fallthru
      _
    %1323 = vsyncpa [#allocation3], 1
    %1324 = vsyncpa [#allocation4], 1

</llo_original>
